<compile_context>
chip_gen: v6e
topology: v6e:2x2x1
jax: 0.10.0
libtpu: 0.0.40
codegen_flags: <defaults>
</compile_context>

<pallas_src>
import jax
import jax.numpy as jnp
from jax.experimental import pallas as pl
from jax.experimental.pallas import tpu as pltpu


def _round_up(x, m):
    return ((x + m - 1) // m) * m


def _decoder_kernel(z_ref, w1_ref, b1_ref, w2_ref, b2_ref, out_ref):
    # Load biases once as values (hoisted; no re-broadcast if an inner loop is
    # ever added).
    b1 = b1_ref[...]                                    # (1, H)
    b2 = b2_ref[...]                                    # (1, O_pad)

    # fc1 + ReLU
    z = z_ref[...]                                      # (Bt, D)
    h = jnp.dot(z, w1_ref[...], preferred_element_type=jnp.float32) + b1
    h = jnp.maximum(h, 0.0)

    # fc2 (out-features padded to a full 128-lane width; padded columns have
    # zero weight and -1e30 bias -> they contribute exactly 0 to the softmax)
    logits = jnp.dot(h, w2_ref[...], preferred_element_type=jnp.float32) + b2

    # numerically-stable softmax along the last dim
    m = jnp.max(logits, axis=-1, keepdims=True)
    e = jnp.exp(logits - m)
    denom = jnp.sum(e, axis=-1, keepdims=True)
    # Approximate reciprocal on the (otherwise idle) EUP slot, plus one Newton
    # step on the VPU to recover full f32 accuracy.
    inv = pl.reciprocal(denom, approx=True)
    inv = inv * (2.0 - denom * inv)
    out_ref[...] = (e * inv).astype(out_ref.dtype)


def lili_decoder(z, w1, b1, w2, b2, *, block_b=256):
    """z: (B, D) f32; w1: (D, H); b1: (H,); w2: (H, O); b2: (O,) -> (B, O)."""
    B, D = z.shape
    H = w1.shape[1]
    O = w2.shape[1]

    # ---- lane-dense output padding (unmasked full-vreg stores) -------------
    O_pad = _round_up(max(O, 128), 128)
    w2p = jnp.zeros((H, O_pad), w2.dtype).at[:, :O].set(w2)
    b2p = jnp.full((1, O_pad), -1e30, dtype=b2.dtype).at[0, :O].set(b2)
    b1p = b1.reshape(1, H)

    # ---- batch tiling (sublane-aligned) -------------------------------------
    bt = min(_round_up(block_b, 8), _round_up(B, 8))
    Bp = _round_up(B, bt)
    zp = z if Bp == B else jnp.pad(z, ((0, Bp - B), (0, 0)))
    num_tiles = Bp // bt

    out_shape = jax.ShapeDtypeStruct((Bp, O_pad), jnp.float32)

    if num_tiles == 1:
        # Single tile: skip the grid / pipeline machinery entirely; all
        # operands sit in VMEM for one kernel invocation.
        out = pl.pallas_call(
            _decoder_kernel,
            out_shape=out_shape,
            in_specs=[pl.BlockSpec(memory_space=pltpu.MemorySpace.VMEM)] * 5,
            out_specs=pl.BlockSpec(memory_space=pltpu.MemorySpace.VMEM),
        )(zp, w1, b1p, w2p, b2p)
    else:
        out = pl.pallas_call(
            _decoder_kernel,
            out_shape=out_shape,
            grid=(num_tiles,),
            in_specs=[
                pl.BlockSpec((bt, D), lambda i: (i, 0)),    # z: tiled on batch
                pl.BlockSpec((D, H), lambda i: (0, 0)),     # weights resident
                pl.BlockSpec((1, H), lambda i: (0, 0)),
                pl.BlockSpec((H, O_pad), lambda i: (0, 0)),
                pl.BlockSpec((1, O_pad), lambda i: (0, 0)),
            ],
            out_specs=pl.BlockSpec((bt, O_pad), lambda i: (i, 0)),
            compiler_params=pltpu.CompilerParams(
                dimension_semantics=("parallel",)),         # megacore on v7x
        )(zp, w1, b1p, w2p, b2p)

    return out[:B, :O]


def _reference(z, w1, b1, w2, b2):
    h = jnp.maximum(z @ w1 + b1, 0.0)
    logits = h @ w2 + b2
    return jax.nn.softmax(logits, axis=-1)


if __name__ == "__main__":
    # Module hyperparams (small, consistent with LILIDecoder.__init__)
    state_size, latent_size = 4, 4
    hidden_size, output_size = 32, 8
    input_dim = state_size + latent_size
    batch = 2

    key = jax.random.PRNGKey(0)
    k_z, k_w1, k_b1, k_w2, k_b2, k_big = jax.random.split(key, 6)

    # Deterministic param init (PyTorch-Linear-style uniform bounds).
    bound1 = 1.0 / jnp.sqrt(input_dim)
    bound2 = 1.0 / jnp.sqrt(hidden_size)
    # PyTorch stores weight as (out, in); build that way then transpose (glue).
    w1_torch = jax.random.uniform(k_w1, (hidden_size, input_dim),
                                  minval=-bound1, maxval=bound1,
                                  dtype=jnp.float32)
    b1 = jax.random.uniform(k_b1, (hidden_size,), minval=-bound1,
                            maxval=bound1, dtype=jnp.float32)
    w2_torch = jax.random.uniform(k_w2, (output_size, hidden_size),
                                  minval=-bound2, maxval=bound2,
                                  dtype=jnp.float32)
    b2 = jax.random.uniform(k_b2, (output_size,), minval=-bound2,
                            maxval=bound2, dtype=jnp.float32)
    w1 = w1_torch.T  # (input_dim, hidden_size)
    w2 = w2_torch.T  # (hidden_size, output_size)

    # z = concat(state, latent) along the feature axis -> (batch, input_dim)
    z = jax.random.normal(k_z, (batch, input_dim), dtype=jnp.float32)

    out = jax.block_until_ready(lili_decoder(z, w1, b1, w2, b2))
    ref = _reference(z, w1, b1, w2, b2)
    assert out.shape == (batch, output_size)
    assert jnp.allclose(out, ref, atol=1e-5, rtol=1e-5)
    assert jnp.allclose(jnp.sum(out, axis=-1), 1.0, atol=1e-5)

    # Also exercise the batched (grid > 1, weights-resident, parallel) path.
    z_big = jax.random.normal(k_big, (512, input_dim), dtype=jnp.float32)
    out_big = jax.block_until_ready(lili_decoder(z_big, w1, b1, w2, b2))
    ref_big = _reference(z_big, w1, b1, w2, b2)
    assert out_big.shape == (512, output_size)
    assert jnp.allclose(out_big, ref_big, atol=1e-5, rtol=1e-5)

    print("KERNEL_OK")
</pallas_src>

<mosaic_0001>
module attributes {stable_mosaic.version = 11 : i64} {
  func.func @_decoder_kernel(%arg0: memref<8x8xf32, #tpu.memory_space<vmem>>, %arg1: memref<8x32xf32, #tpu.memory_space<vmem>>, %arg2: memref<1x32xf32, #tpu.memory_space<vmem>>, %arg3: memref<32x128xf32, #tpu.memory_space<vmem>>, %arg4: memref<1x128xf32, #tpu.memory_space<vmem>>, %arg5: memref<8x128xf32, #tpu.memory_space<vmem>>) attributes {dimension_semantics = [], scalar_prefetch = 0 : i64, scratch_operands = 0 : i64, tpu.core_type = #tpu.core_type<tc>} {
    %c0 = arith.constant 0 : index
    %c0_0 = arith.constant 0 : index
    %0 = vector.load %arg2[%c0, %c0_0] : memref<1x32xf32, #tpu.memory_space<vmem>>, vector<1x32xf32>
    %c0_1 = arith.constant 0 : index
    %c0_2 = arith.constant 0 : index
    %1 = vector.load %arg4[%c0_1, %c0_2] : memref<1x128xf32, #tpu.memory_space<vmem>>, vector<1x128xf32>
    %c0_3 = arith.constant 0 : index
    %c0_4 = arith.constant 0 : index
    %2 = vector.load %arg0[%c0_3, %c0_4] : memref<8x8xf32, #tpu.memory_space<vmem>>, vector<8x8xf32>
    %c0_5 = arith.constant 0 : index
    %c0_6 = arith.constant 0 : index
    %3 = vector.load %arg1[%c0_5, %c0_6] : memref<8x32xf32, #tpu.memory_space<vmem>>, vector<8x32xf32>
    %cst = arith.constant dense<0.000000e+00> : vector<8x32xf32>
    %4 = tpu.matmul %2, %3, %cst {dimension_numbers = #tpu.dot_dimension_numbers<[1], [0], [0], [1], [0, 0, 1, 1], [], []>} : vector<8x8xf32>, vector<8x32xf32>, vector<8x32xf32> -> vector<8x32xf32>
    %5 = vector.broadcast %0 : vector<1x32xf32> to vector<8x32xf32>
    %6 = arith.addf %4, %5 : vector<8x32xf32>
    %cst_7 = arith.constant 0.000000e+00 : f32
    %7 = vector.broadcast %cst_7 : f32 to vector<8x32xf32>
    %8 = arith.maximumf %6, %7 : vector<8x32xf32>
    %c0_8 = arith.constant 0 : index
    %c0_9 = arith.constant 0 : index
    %9 = vector.load %arg3[%c0_8, %c0_9] : memref<32x128xf32, #tpu.memory_space<vmem>>, vector<32x128xf32>
    %cst_10 = arith.constant dense<0.000000e+00> : vector<8x128xf32>
    %10 = tpu.matmul %8, %9, %cst_10 {dimension_numbers = #tpu.dot_dimension_numbers<[1], [0], [0], [1], [0, 0, 1, 1], [], []>} : vector<8x32xf32>, vector<32x128xf32>, vector<8x128xf32> -> vector<8x128xf32>
    %11 = vector.broadcast %1 : vector<1x128xf32> to vector<8x128xf32>
    %12 = arith.addf %10, %11 : vector<8x128xf32>
    %cst_11 = arith.constant dense<0xFF800000> : vector<8xf32>
    %13 = vector.multi_reduction <maximumf>, %12, %cst_11 [1] : vector<8x128xf32> to vector<8xf32>
    %14 = vector.shape_cast %13 : vector<8xf32> to vector<8x1xf32>
    %15 = vector.broadcast %14 : vector<8x1xf32> to vector<8x128xf32>
    %16 = arith.subf %12, %15 : vector<8x128xf32>
    %17 = math.exp %16 : vector<8x128xf32>
    %cst_12 = arith.constant dense<0.000000e+00> : vector<8xf32>
    %18 = vector.multi_reduction <add>, %17, %cst_12 [1] : vector<8x128xf32> to vector<8xf32>
    %19 = vector.shape_cast %18 : vector<8xf32> to vector<8x1xf32>
    %20 = tpu.reciprocal %19 {approx = true} : vector<8x1xf32> -> vector<8x1xf32>
    %21 = arith.mulf %19, %20 : vector<8x1xf32>
    %cst_13 = arith.constant 2.000000e+00 : f32
    %22 = vector.broadcast %cst_13 : f32 to vector<8x1xf32>
    %23 = arith.subf %22, %21 : vector<8x1xf32>
    %24 = arith.mulf %20, %23 : vector<8x1xf32>
    %25 = vector.broadcast %24 : vector<8x1xf32> to vector<8x128xf32>
    %26 = arith.mulf %17, %25 : vector<8x128xf32>
    %c0_14 = arith.constant 0 : index
    %c0_15 = arith.constant 0 : index
    %27 = vector.load %arg5[%c0_14, %c0_15] : memref<8x128xf32, #tpu.memory_space<vmem>>, vector<8x128xf32>
    tpu.vector_store %arg5[%c0_14, %c0_15], %26 {strides = array<i32>} : memref<8x128xf32, #tpu.memory_space<vmem>>, vector<8x128xf32>,
    return
  }
}

</mosaic_0001>

<llo_original>
// kernel: tpu_custom_call.1
$region0: #{tpu_custom_call.1}
  #allocation0 [shape = 'u32[]', space=smem, size = 0x4, offset = 0x4, fixed_abs, tag = 'smem constant byte address 0x4 - core index']
  #allocation1 [shape = 'u32[144,128]{1,0:T(1,128)}', space=vmem, size = 0x12000, scoped, tag = 'internal scratch']
  %s0 = inlined_call_operand.hbm [shape: f32[8,8], index: 0, kind: input, shape index: {}]
  %s1 = inlined_call_operand.hbm [shape: f32[8,32], index: 1, kind: input, shape index: {}]
  %s2 = inlined_call_operand.vmem [shape: f32[1,32], index: 2, kind: input, shape index: {}]
  %s3 = inlined_call_operand.hbm [shape: f32[32,128], index: 3, kind: input, shape index: {}]
  %s4 = inlined_call_operand.vmem [shape: f32[1,128], index: 4, kind: input, shape index: {}]
  %s5 = inlined_call_operand.hbm [shape: f32[8,128], index: 5, kind: output, shape index: {}]
  %s6 = sld [smem:[#allocation0]]
  $region42: #{tpu_custom_call.1} parent=0
    _
  %s8 = ssub.s32 1, %s6
  %s9 = scalar_select 0, %s8, %s6
  $region1: #{tpu_custom_call.1} parent=0
    #allocation2 [shape = 'u8[4096]{0}', space=vmem, size = 0x1000, scoped, tag = 'input window, operand 0, single buffered']
    #allocation3 [shape = 's32[1]{0}', space=sflag, size = 0x4, scoped, tag = 'scoped memory for tpu_custom_call.1']
    #allocation4 [shape = 's32[1]{0}', space=sflag, size = 0x4, scoped, tag = 'scoped memory for tpu_custom_call.1']
    #allocation5 [shape = 'u8[4096]{0}', space=vmem, size = 0x1000, scoped, tag = 'input window, operand 1, single buffered']
    #allocation6 [shape = 's32[1]{0}', space=sflag, size = 0x4, scoped, tag = 'scoped memory for tpu_custom_call.1']
    #allocation7 [shape = 'u8[16384]{0}', space=vmem, size = 0x4000, scoped, tag = 'input window, operand 3, single buffered']
    #allocation8 [shape = 'u8[4096]{0}', space=vmem, size = 0x1000, scoped, tag = 'output window, operand 0, single buffered']
    %10 = vsyncpa [#allocation3], 0
    %11 = vsyncpa [#allocation6], 0
    %12 = vsyncpa [#allocation4], 0
    // Predicated region
    $region2: #{tpu_custom_call.1} parent=1 // pred_check
      _
    $region3: #{tpu_custom_call.1} parent=1 // pred_check_branch
      %14 = sbr.rel (0) target = $region5
    $region4: #{tpu_custom_call.1} parent=1 // pred_region
      %s16 = ssub.s32 128, 128
      %17 = vsyncadd [#allocation3], %s16
      %s19 = sshll.u32 [#allocation2], 4
      %s20 = int_to_ptr.vmem [resolvable:$true] %s19
      %22 = dma.hbm_to_vmem [thread:$0]  %s0, 128, %s20, [#allocation3]
    $region5: #{tpu_custom_call.1} parent=1 // pred_fallthru
      _
    // Predicated region
    $region6: #{tpu_custom_call.1} parent=1 // pred_check
      _
    $region7: #{tpu_custom_call.1} parent=1 // pred_check_branch
      %24 = sbr.rel (0) target = $region9
    $region8: #{tpu_custom_call.1} parent=1 // pred_region
      %s26 = ssub.s32 128, 128
      %27 = vsyncadd [#allocation6], %s26
      %s29 = sshll.u32 [#allocation5], 4
      %s30 = int_to_ptr.vmem [resolvable:$true] %s29
      %32 = dma.hbm_to_vmem [thread:$0]  %s1, 128, %s30, [#allocation6]
    $region9: #{tpu_custom_call.1} parent=1 // pred_fallthru
      _
    // Predicated region
    $region10: #{tpu_custom_call.1} parent=1 // pred_check
      _
    $region11: #{tpu_custom_call.1} parent=1 // pred_check_branch
      %34 = sbr.rel (0) target = $region13
    $region12: #{tpu_custom_call.1} parent=1 // pred_region
      _
    $region13: #{tpu_custom_call.1} parent=1 // pred_fallthru
      _
    // Predicated region
    $region14: #{tpu_custom_call.1} parent=1 // pred_check
      _
    $region15: #{tpu_custom_call.1} parent=1 // pred_check_branch
      %36 = sbr.rel (0) target = $region17
    $region16: #{tpu_custom_call.1} parent=1 // pred_region
      %s38 = ssub.s32 512, 512
      %39 = vsyncadd [#allocation6], %s38
      %s40 = sshll.u32 [#allocation7], 4
      %s41 = int_to_ptr.vmem [resolvable:$true] %s40
      %46 = dma.hbm_to_vmem [thread:$0]  %s3, 512, %s41, [#allocation6], 128, 128, 8
    $region17: #{tpu_custom_call.1} parent=1 // pred_fallthru
      _
    // Predicated region
    $region18: #{tpu_custom_call.1} parent=1 // pred_check
      _
    $region19: #{tpu_custom_call.1} parent=1 // pred_check_branch
      %48 = sbr.rel (0) target = $region21
    $region20: #{tpu_custom_call.1} parent=1 // pred_region
      _
    $region21: #{tpu_custom_call.1} parent=1 // pred_fallthru
      _
    // Predicated region
    $region22: #{tpu_custom_call.1} parent=1 // pred_check
      _
    $region23: #{tpu_custom_call.1} parent=1 // pred_check_branch
      %50 = sbr.rel (0) target = $region25
    $region24: #{tpu_custom_call.1} parent=1 // pred_region
      %51 = dma.done [#allocation3], 128
    $region25: #{tpu_custom_call.1} parent=1 // pred_fallthru
      _
    // Predicated region
    $region26: #{tpu_custom_call.1} parent=1 // pred_check
      _
    $region27: #{tpu_custom_call.1} parent=1 // pred_check_branch
      %53 = sbr.rel (0) target = $region29
    $region28: #{tpu_custom_call.1} parent=1 // pred_region
      %54 = dma.done [#allocation6], 128
    $region29: #{tpu_custom_call.1} parent=1 // pred_fallthru
      _
    // Predicated region
    $region30: #{tpu_custom_call.1} parent=1 // pred_check
      _
    $region31: #{tpu_custom_call.1} parent=1 // pred_check_branch
      %56 = sbr.rel (0) target = $region33
    $region32: #{tpu_custom_call.1} parent=1 // pred_region
      %57 = dma.done [#allocation6], 512
    $region33: #{tpu_custom_call.1} parent=1 // pred_fallthru
      _
    %v58 = vld [vmem:[%s2] sm:$0x1]
    %v59 = vld [vmem:[%s4] sm:$0x1]
    %v60 = vld [vmem:[#allocation2] sm:$0xff]
    %v61 = vld [vmem:[#allocation5] sm:$0xff]
    %v63 = vlaneseq
    %v64 = vshrl.u32 %v63, 7
    %v65 = vsub.s32 0, %v64
    %v66 = vrot.slane %v58, %v65
    %vm68 = vcmask 64512
    %v70 = vsel %vm68, %v60, 0
    %72 = vmatprep.subr.mxu0 0.0
    %73 = vmatpush1.msra.mxu0 0.0
    %74 = vmatprep.subr.mxu0 0.0
    %75 = vmatpush1.msra.mxu0 0.0
    %76 = vmatprep.subr.mxu0 0.0
    %77 = vmatpush1.msra.mxu0 0.0
    %78 = vmatprep.subr.mxu0 0.0
    %79 = vmatpush1.msra.mxu0 0.0
    %80 = vmatprep.subr.mxu0 0.0
    %81 = vmatpush1.msra.mxu0 0.0
    %82 = vmatprep.subr.mxu0 0.0
    %83 = vmatpush1.msra.mxu0 0.0
    %84 = vmatprep.subr.mxu0 0.0
    %85 = vmatpush1.msra.mxu0 0.0
    %86 = vmatprep.subr.mxu0 0.0
    %87 = vmatpush1.msra.mxu0 0.0
    %88 = vmatprep.subr.mxu0 0.0
    %89 = vmatpush1.msra.mxu0 0.0
    %90 = vmatprep.subr.mxu0 0.0
    %91 = vmatpush1.msra.mxu0 0.0
    %92 = vmatprep.subr.mxu0 0.0
    %93 = vmatpush1.msra.mxu0 0.0
    %94 = vmatprep.subr.mxu0 0.0
    %95 = vmatpush1.msra.mxu0 0.0
    %96 = vmatprep.subr.mxu0 0.0
    %97 = vmatpush1.msra.mxu0 0.0
    %98 = vmatprep.subr.mxu0 0.0
    %99 = vmatpush1.msra.mxu0 0.0
    %100 = vmatprep.subr.mxu0 0.0
    %101 = vmatpush1.msra.mxu0 0.0
    %102 = vmatprep.subr.mxu0 0.0
    %103 = vmatpush1.msra.mxu0 %v61
    %104 = vmatprep.subr.mxu0 0.0
    %105 = vmatpush2.msra.mxu0 0.0
    %106 = vmatprep.subr.mxu0 0.0
    %107 = vmatpush2.msra.mxu0 0.0
    %108 = vmatprep.subr.mxu0 0.0
    %109 = vmatpush2.msra.mxu0 0.0
    %110 = vmatprep.subr.mxu0 0.0
    %111 = vmatpush2.msra.mxu0 0.0
    %112 = vmatprep.subr.mxu0 0.0
    %113 = vmatpush2.msra.mxu0 0.0
    %114 = vmatprep.subr.mxu0 0.0
    %115 = vmatpush2.msra.mxu0 0.0
    %116 = vmatprep.subr.mxu0 0.0
    %117 = vmatpush2.msra.mxu0 0.0
    %118 = vmatprep.subr.mxu0 0.0
    %119 = vmatpush2.msra.mxu0 0.0
    %120 = vmatprep.subr.mxu0 0.0
    %121 = vmatpush2.msra.mxu0 0.0
    %122 = vmatprep.subr.mxu0 0.0
    %123 = vmatpush2.msra.mxu0 0.0
    %124 = vmatprep.subr.mxu0 0.0
    %125 = vmatpush2.msra.mxu0 0.0
    %126 = vmatprep.subr.mxu0 0.0
    %127 = vmatpush2.msra.mxu0 0.0
    %128 = vmatprep.subr.mxu0 0.0
    %129 = vmatpush2.msra.mxu0 0.0
    %130 = vmatprep.subr.mxu0 0.0
    %131 = vmatpush2.msra.mxu0 0.0
    %132 = vmatprep.subr.mxu0 0.0
    %133 = vmatpush2.msra.mxu0 0.0
    %134 = vmatprep.subr.mxu0 0.0
    %135 = vmatpush2.msra.mxu0 0.0
    %136 = vmatprep.mubr.f32.mxu0 0.0
    %137 = vmatmul.mubr.f32.gmra.mxu0 %v70
    %v138 = vpop.f32.mrf.mxu0
    %v139 = vadd.f32 %v66, %v138
    %v140 = vpop.f32.mrf.mxu0
    %141 = vdwg.mxu0
    %v142 = vmax.f32 %v139, 0.0
    %v143 = vld [vmem:[#allocation7] sm:$0xff]
    %v144 = vld [vmem:[#allocation7 + $0x8] sm:$0xff]
    %v145 = vld [vmem:[#allocation7 + $0x10] sm:$0xff]
    %v146 = vld [vmem:[#allocation7 + $0x18] sm:$0xff]
    %v148 = vlaneseq
    %v149 = vshrl.u32 %v148, 7
    %v150 = vsub.s32 0, %v149
    %v151 = vrot.slane %v59, %v150
    %vm153 = vcmask 261120
    %v155 = vsel %vm153, %v142, 0
    %157 = vmatprep.subr.mxu0 0.0
    %158 = vmatpush1.msra.mxu0 0.0
    %159 = vmatprep.subr.mxu0 0.0
    %160 = vmatpush1.msra.mxu0 0.0
    %161 = vmatprep.subr.mxu0 0.0
    %162 = vmatpush1.msra.mxu0 0.0
    %163 = vmatprep.subr.mxu0 0.0
    %164 = vmatpush1.msra.mxu0 0.0
    %165 = vmatprep.subr.mxu0 0.0
    %166 = vmatpush1.msra.mxu0 0.0
    %167 = vmatprep.subr.mxu0 0.0
    %168 = vmatpush1.msra.mxu0 0.0
    %169 = vmatprep.subr.mxu0 0.0
    %170 = vmatpush1.msra.mxu0 0.0
    %171 = vmatprep.subr.mxu0 0.0
    %172 = vmatpush1.msra.mxu0 0.0
    %173 = vmatprep.subr.mxu0 0.0
    %174 = vmatpush1.msra.mxu0 0.0
    %175 = vmatprep.subr.mxu0 0.0
    %176 = vmatpush1.msra.mxu0 0.0
    %177 = vmatprep.subr.mxu0 0.0
    %178 = vmatpush1.msra.mxu0 0.0
    %179 = vmatprep.subr.mxu0 0.0
    %180 = vmatpush1.msra.mxu0 0.0
    %181 = vmatprep.subr.mxu0 0.0
    %182 = vmatpush1.msra.mxu0 %v146
    %183 = vmatprep.subr.mxu0 0.0
    %184 = vmatpush1.msra.mxu0 %v145
    %185 = vmatprep.subr.mxu0 0.0
    %186 = vmatpush1.msra.mxu0 %v144
    %187 = vmatprep.subr.mxu0 0.0
    %188 = vmatpush1.msra.mxu0 %v143
    %189 = vmatprep.subr.mxu0 0.0
    %190 = vmatpush2.msra.mxu0 0.0
    %191 = vmatprep.subr.mxu0 0.0
    %192 = vmatpush2.msra.mxu0 0.0
    %193 = vmatprep.subr.mxu0 0.0
    %194 = vmatpush2.msra.mxu0 0.0
    %195 = vmatprep.subr.mxu0 0.0
    %196 = vmatpush2.msra.mxu0 0.0
    %197 = vmatprep.subr.mxu0 0.0
    %198 = vmatpush2.msra.mxu0 0.0
    %199 = vmatprep.subr.mxu0 0.0
    %200 = vmatpush2.msra.mxu0 0.0
    %201 = vmatprep.subr.mxu0 0.0
    %202 = vmatpush2.msra.mxu0 0.0
    %203 = vmatprep.subr.mxu0 0.0
    %204 = vmatpush2.msra.mxu0 0.0
    %205 = vmatprep.subr.mxu0 0.0
    %206 = vmatpush2.msra.mxu0 0.0
    %207 = vmatprep.subr.mxu0 0.0
    %208 = vmatpush2.msra.mxu0 0.0
    %209 = vmatprep.subr.mxu0 0.0
    %210 = vmatpush2.msra.mxu0 0.0
    %211 = vmatprep.subr.mxu0 0.0
    %212 = vmatpush2.msra.mxu0 0.0
    %213 = vmatprep.subr.mxu0 0.0
    %214 = vmatpush2.msra.mxu0 0.0
    %215 = vmatprep.subr.mxu0 0.0
    %216 = vmatpush2.msra.mxu0 0.0
    %217 = vmatprep.subr.mxu0 0.0
    %218 = vmatpush2.msra.mxu0 0.0
    %219 = vmatprep.subr.mxu0 0.0
    %220 = vmatpush2.msra.mxu0 0.0
    %221 = vmatprep.mubr.f32.mxu0 0.0
    %222 = vmatmul.mubr.f32.gmra.mxu0 %v155
    %v223 = vpop.f32.mrf.mxu0
    %v224 = vadd.f32 %v151, %v223
    %v225 = vpop.f32.mrf.mxu0
    %226 = vdwg.mxu0
    %227 = vmax.xlane.f32.xlu0 %v224
    %v228 = vpop.xlane.xlu0 %227
    %v229 = vsub.f32 %v224, %v228
    %v230 = vmul.f32 %v229, 1.442695
    %v231 = vpow.pop %v230
    %232 = vadd.xlane.f32.xlu0 %v231
    %v233 = vpop.xlane.xlu0 %232
    %v234 = vrcp.pop %v233
    %v235 = vmul.f32 %v233, %v234
    %v236 = vsub.f32 2.0, %v235
    %v237 = vmul.f32 %v234, %v236
    %v238 = vmul.f32 %v231, %v237
    %239 = vst [vmem:[#allocation8] sm:$0xff] %v238
    // Predicated region
    $region34: #{tpu_custom_call.1} parent=1 // pred_check
      _
    $region35: #{tpu_custom_call.1} parent=1 // pred_check_branch
      %241 = sbr.rel (0) target = $region37
    $region36: #{tpu_custom_call.1} parent=1 // pred_region
      %s243 = ssub.s32 128, 128
      %244 = vsyncadd [#allocation4], %s243
      %s246 = sshll.u32 [#allocation8], 4
      %s247 = int_to_ptr.vmem [resolvable:$true] %s246
      %249 = dma.vmem_to_hbm [thread:$0]  %s247, 128, %s5, [#allocation4]
    $region37: #{tpu_custom_call.1} parent=1 // pred_fallthru
      _
    // Predicated region
    $region38: #{tpu_custom_call.1} parent=1 // pred_check
      _
    $region39: #{tpu_custom_call.1} parent=1 // pred_check_branch
      %251 = sbr.rel (0) target = $region41
    $region40: #{tpu_custom_call.1} parent=1 // pred_region
      %252 = dma.done [#allocation4], 128
    $region41: #{tpu_custom_call.1} parent=1 // pred_fallthru
      _
    %253 = vsyncpa [#allocation3], 1
    %254 = vsyncpa [#allocation6], 1
    %255 = vsyncpa [#allocation4], 1

</llo_original>
